<compile_context>
chip_gen: v6e
topology: v6e:2x2x1
jax: 0.10.0
libtpu: 0.0.40
codegen_flags: <defaults>
</compile_context>

<pallas_src>
import math
import functools

import jax
import jax.numpy as jnp
from jax.experimental import pallas as pl
from jax.experimental.pallas import tpu as pltpu


def _round_up(a, b):
    return (a + b - 1) // b * b


def _cdiv(a, b):
    return (a + b - 1) // b


# ----------------------------------------------------------------------------
# Kernels
# ----------------------------------------------------------------------------
def ffn_kernel_resident(x_ref, w1_ref, b1_ref, w2_ref, b2_ref, o_ref, *, chunk):
    """Single k step: weights fully VMEM-resident (loaded once for the whole
    grid).  GELU + fc2 are processed in d_inner chunks of `chunk` columns so
    the f32 intermediate h stays small; output is written directly (no
    accumulator scratch / zero-init / read-modify-write)."""
    x = x_ref[...]
    din = w1_ref.shape[1]
    inv_sqrt2 = 1.0 / math.sqrt(2.0)
    acc = jnp.zeros((x_ref.shape[0], o_ref.shape[1]), jnp.float32)
    c = 0
    while c < din:  # static Python loop -> fully unrolled static slices
        cs = min(chunk, din - c)
        h = jnp.dot(x, w1_ref[:, c:c + cs],
                    preferred_element_type=jnp.float32) + b1_ref[:, c:c + cs]
        # Exact (erf-based) GELU, matching torch.nn.GELU() default.
        h = 0.5 * h * (1.0 + jax.lax.erf(h * inv_sqrt2))
        acc = acc + jnp.dot(h.astype(w2_ref.dtype), w2_ref[c:c + cs, :],
                            preferred_element_type=jnp.float32)
        c += cs
    o_ref[...] = (acc + b2_ref[...]).astype(o_ref.dtype)


def ffn_kernel_acc(x_ref, w1_ref, b1_ref, w2_ref, b2_ref, o_ref, acc_ref):
    """Multi k-step fallback (weights too large for VMEM): f32 accumulator
    resident across the reduction (last) grid axis."""
    k = pl.program_id(1)

    @pl.when(k == 0)
    def _():
        acc_ref[...] = jnp.zeros_like(acc_ref)

    x = x_ref[...]
    h = jnp.dot(x, w1_ref[...], preferred_element_type=jnp.float32) + b1_ref[...]
    h = 0.5 * h * (1.0 + jax.lax.erf(h * (1.0 / math.sqrt(2.0))))
    acc_ref[...] += jnp.dot(h.astype(w2_ref.dtype), w2_ref[...],
                            preferred_element_type=jnp.float32)

    @pl.when(k == pl.num_programs(1) - 1)
    def _():
        o_ref[...] = (acc_ref[...] + b2_ref[...]).astype(o_ref.dtype)


# ----------------------------------------------------------------------------
# Wrapper
# ----------------------------------------------------------------------------
def positionwise_feed_forward(x, w1, b1, w2, b2, *,
                              tile_m=None, tile_k=None, inner_chunk=512):
    """x: [batch, seq, d_model] -> [batch, seq, d_model].

    w1: [d_model, d_inner], b1: [d_inner], w2: [d_inner, d_model], b2: [d_model]
    (weights transposed relative to torch.nn.Linear so the kernel does x @ W).
    Pass `tile_k` to force the multi-k (streamed-weights) path.
    """
    B, S, D = x.shape
    Din = w1.shape[1]
    N = B * S
    xb = jnp.dtype(x.dtype).itemsize
    wb = jnp.dtype(w1.dtype).itemsize

    # ---- per-generation VMEM capacity (v7x has only 64 MiB per TC) ---------
    try:
        vmem_cap = int(pltpu.get_tpu_info().vmem_capacity_bytes)
    except Exception:
        vmem_cap = 64 << 20  # conservative fallback (v7x)
    vmem_budget = int(vmem_cap * 0.70)   # selection budget (leave headroom)

    # ---- row tiling: MXU-friendly alignment, >= 2 tiles for megacore -------
    sub = 16 if xb < 4 else 8            # sublane packing (bf16 / f32)
    tm_target = tile_m if tile_m is not None else 512
    if N >= 256:
        align = 256
    elif N >= 128:
        align = 128
    else:
        align = sub
    tm = _round_up(min(tm_target, _round_up(N, align)), align)
    # Ensure at least two row tiles when the problem allows, so the "parallel"
    # row axis can shard across both v7x TensorCores.
    if _cdiv(N, tm) < 2 and N > 128:
        tm = _round_up(_cdiv(N, 2), 128 if align < 128 else align)
    Np = _round_up(N, tm)

    xf = x.reshape(N, D)
    if Np != N:
        xf = jnp.pad(xf, ((0, Np - N), (0, 0)))

    # ---- d_inner tiling: prefer fully VMEM-resident weights ---------------
    Din128 = _round_up(Din, 128)
    fixed_vmem = (2 * tm * D * xb) * 2            # x + out tiles (double buffered)
    fixed_vmem += 2 * (Din128 + D) * 4            # biases (f32)
    resident_w_vmem = 2 * 2 * D * Din128 * wb     # W1 + W2, double buffered
    force_multi = tile_k is not None and _round_up(tile_k, 128) < Din128

    if (not force_multi) and fixed_vmem + resident_w_vmem <= vmem_budget:
        # ---------------- resident-weight configuration --------------------
        Din_p = Din128
        kt = 1
        tk = Din_p
    else:
        # ---------------- streamed-weight fallback --------------------------
        tk_target = tile_k if tile_k is not None else 512
        tk = _round_up(min(tk_target, Din128), 128)
        while tk > 128 and (fixed_vmem + 2 * 2 * D * tk * wb + tm * D * 4
                            > vmem_budget):
            tk -= 128
        Din_p = _round_up(Din, tk)
        kt = Din_p // tk

    # Zero-pad d_inner (GELU(0) = 0, padded b1 entries are 0 -> no effect).
    if Din_p != Din:
        w1 = jnp.pad(w1, ((0, 0), (0, Din_p - Din)))
        b1 = jnp.pad(b1, ((0, Din_p - Din),))
        w2 = jnp.pad(w2, ((0, Din_p - Din), (0, 0)))

    b1_2d = b1.reshape(1, Din_p).astype(jnp.float32)
    b2_2d = b2.reshape(1, D).astype(jnp.float32)

    # ---- VMEM limit: below physical capacity (v7x-safe), above actual need -
    chunk = min(inner_chunk, Din_p)
    temps = tm * chunk * 4 + tm * D * 4           # h chunk + acc (f32)
    if kt == 1:
        needed = fixed_vmem + resident_w_vmem + temps
        w_traffic = 2 * D * Din_p * wb            # weights DMA'd once per call
    else:
        needed = fixed_vmem + 2 * 2 * D * tk * wb + tm * D * 4 + temps
        w_traffic = (Np // tm) * 2 * D * Din_p * wb   # re-streamed per row tile
    vmem_limit = min(max(int(needed * 1.25) + (8 << 20), 32 << 20),
                     int(vmem_cap * 0.90))
    vmem_limit = max(vmem_limit, min(needed + (4 << 20), int(vmem_cap * 0.90)))

    cost = pl.CostEstimate(
        flops=4 * Np * D * Din_p,                 # two matmuls, 2*N*D*Din each
        transcendentals=Np * Din_p,               # erf
        bytes_accessed=int(Np * D * xb * 2        # x + out
                           + w_traffic            # actual weight HBM traffic
                           + (Din_p + D) * 4),    # biases
    )

    if kt == 1:
        kernel = functools.partial(ffn_kernel_resident, chunk=chunk)
        grid_spec = pltpu.PrefetchScalarGridSpec(
            num_scalar_prefetch=0,
            grid=(Np // tm,),
            in_specs=[
                pl.BlockSpec((tm, D), lambda i: (i, 0)),        # x rows
                pl.BlockSpec((D, Din_p), lambda i: (0, 0)),     # W1 (resident)
                pl.BlockSpec((1, Din_p), lambda i: (0, 0)),     # b1
                pl.BlockSpec((Din_p, D), lambda i: (0, 0)),     # W2 (resident)
                pl.BlockSpec((1, D), lambda i: (0, 0)),         # b2
            ],
            out_specs=pl.BlockSpec((tm, D), lambda i: (i, 0)),
        )
        dims = ("parallel",)
    else:
        kernel = ffn_kernel_acc
        grid_spec = pltpu.PrefetchScalarGridSpec(
            num_scalar_prefetch=0,
            grid=(Np // tm, kt),
            in_specs=[
                pl.BlockSpec((tm, D), lambda i, k: (i, 0)),     # x rows
                pl.BlockSpec((D, tk), lambda i, k: (0, k)),     # W1 slab
                pl.BlockSpec((1, tk), lambda i, k: (0, k)),     # b1 slab
                pl.BlockSpec((tk, D), lambda i, k: (k, 0)),     # W2 slab
                pl.BlockSpec((1, D), lambda i, k: (0, 0)),      # b2
            ],
            out_specs=pl.BlockSpec((tm, D), lambda i, k: (i, 0)),
            scratch_shapes=[pltpu.VMEM((tm, D), jnp.float32)],
        )
        dims = ("parallel", "arbitrary")

    out = pl.pallas_call(
        kernel,
        out_shape=jax.ShapeDtypeStruct((Np, D), x.dtype),
        grid_spec=grid_spec,
        compiler_params=pltpu.CompilerParams(
            dimension_semantics=dims,
            vmem_limit_bytes=vmem_limit,
        ),
        cost_estimate=cost,
    )(xf, w1, b1_2d, w2, b2_2d)

    return out[:N].reshape(B, S, D)


# ----------------------------------------------------------------------------
# Init + reference
# ----------------------------------------------------------------------------
def truncated_normal_init(key, shape, std=0.02, dtype=jnp.float32):
    # Same semantics as the torch helper: normal(0, std) with values outside
    # +/- 2*std resampled.
    return std * jax.random.truncated_normal(key, -2.0, 2.0, shape, dtype)


def _reference(x, w1, b1, w2, b2):
    B, S, D = x.shape
    h = x.reshape(-1, D).astype(jnp.float32) @ w1.astype(jnp.float32) + b1
    h = 0.5 * h * (1.0 + jax.lax.erf(h / math.sqrt(2.0)))
    y = h @ w2.astype(jnp.float32) + b2
    return y.reshape(B, S, D)


if __name__ == "__main__":
    d_model = 128      # lane-dense output (multiple of 128)
    d_inner = 384      # not a multiple of 128*tile -> exercises d_inner padding
    batch, seq = 2, 72  # N = 144 -> exercises row padding / 2-row-tile split

    key = jax.random.PRNGKey(0)
    kx, k1, k2 = jax.random.split(key, 3)

    x = jax.random.normal(kx, (batch, seq, d_model), dtype=jnp.float32)
    # fc1.weight in torch is [d_inner, d_model]; we store transposed [d_model, d_inner].
    w1 = truncated_normal_init(k1, (d_model, d_inner), std=0.02)
    b1 = jnp.zeros((d_inner,), jnp.float32)
    w2 = truncated_normal_init(k2, (d_inner, d_model), std=0.02)
    b2 = jnp.zeros((d_model,), jnp.float32)

    y_ref = _reference(x, w1, b1, w2, b2)

    # ---- f32, resident-weight (single k step, no accumulator) path ---------
    y = positionwise_feed_forward(x, w1, b1, w2, b2)
    y = jax.block_until_ready(y)
    assert jnp.allclose(y, y_ref, atol=2e-5, rtol=2e-5), \
        "f32 resident-weight path mismatch vs reference"

    # ---- f32, forced multi-k (streamed-weight accumulator) path ------------
    y_mk = positionwise_feed_forward(x, w1, b1, w2, b2, tile_m=128, tile_k=128)
    y_mk = jax.block_until_ready(y_mk)
    assert jnp.allclose(y_mk, y_ref, atol=2e-5, rtol=2e-5), \
        "f32 multi-k path mismatch vs reference"

    # ---- bf16 matmul-input path (f32 MXU accumulation, f32 bias/GELU) ------
    # TODO(synk): on v5e, auto-casting f32 inputs to bf16 here (as the review
    # suggests) would further speed up the MXU; left opt-in via input dtype.
    x_bf = x.astype(jnp.bfloat16)
    w1_bf = w1.astype(jnp.bfloat16)
    w2_bf = w2.astype(jnp.bfloat16)
    y_bf = positionwise_feed_forward(x_bf, w1_bf, b1, w2_bf, b2)
    y_bf = jax.block_until_ready(y_bf)
    y_bf_ref = _reference(x_bf, w1_bf, b1, w2_bf, b2)
    assert jnp.allclose(y_bf.astype(jnp.float32), y_bf_ref,
                        atol=1e-2, rtol=5e-2), "bf16 mismatch vs reference"

    print("KERNEL_OK")
</pallas_src>

<mosaic_0001>
module attributes {stable_mosaic.version = 11 : i64} {
  func.func @ffn_kernel_resident(%arg0: i32, %arg1: memref<128x128xf32, #tpu.memory_space<vmem>>, %arg2: memref<128x384xf32, #tpu.memory_space<vmem>>, %arg3: memref<1x384xf32, #tpu.memory_space<vmem>>, %arg4: memref<384x128xf32, #tpu.memory_space<vmem>>, %arg5: memref<1x128xf32, #tpu.memory_space<vmem>>, %arg6: memref<128x128xf32, #tpu.memory_space<vmem>>) attributes {dimension_semantics = [#tpu.dimension_semantics<parallel>], iteration_bounds = array<i64: 2>, scalar_prefetch = 0 : i64, scratch_operands = 0 : i64, tpu.core_type = #tpu.core_type<tc>, window_params = [{transform_indices = @transform_0, window_bounds = array<i64: 128, 128>}, {pipeline_mode = #tpu.pipeline_mode<synchronous>, transform_indices = @transform_1, window_bounds = array<i64: 128, 384>}, {pipeline_mode = #tpu.pipeline_mode<synchronous>, transform_indices = @transform_2, window_bounds = array<i64: 1, 384>}, {pipeline_mode = #tpu.pipeline_mode<synchronous>, transform_indices = @transform_3, window_bounds = array<i64: 384, 128>}, {pipeline_mode = #tpu.pipeline_mode<synchronous>, transform_indices = @transform_4, window_bounds = array<i64: 1, 128>}, {transform_indices = @transform_5, window_bounds = array<i64: 128, 128>}]} {
    %c0 = arith.constant 0 : index
    %c0_0 = arith.constant 0 : index
    %0 = vector.load %arg1[%c0, %c0_0] : memref<128x128xf32, #tpu.memory_space<vmem>>, vector<128x128xf32>
    %cst = arith.constant 0.000000e+00 : f32
    %1 = vector.broadcast %cst : f32 to vector<128x128xf32>
    %c0_1 = arith.constant 0 : index
    %c0_2 = arith.constant 0 : index
    %2 = vector.load %arg2[%c0_1, %c0_2] : memref<128x384xf32, #tpu.memory_space<vmem>>, vector<128x384xf32>
    %cst_3 = arith.constant dense<0.000000e+00> : vector<128x384xf32>
    %3 = tpu.matmul %0, %2, %cst_3 {dimension_numbers = #tpu.dot_dimension_numbers<[1], [0], [0], [1], [0, 0, 1, 1], [], []>} : vector<128x128xf32>, vector<128x384xf32>, vector<128x384xf32> -> vector<128x384xf32>
    %c0_4 = arith.constant 0 : index
    %c0_5 = arith.constant 0 : index
    %4 = vector.load %arg3[%c0_4, %c0_5] : memref<1x384xf32, #tpu.memory_space<vmem>>, vector<1x384xf32>
    %5 = vector.broadcast %4 : vector<1x384xf32> to vector<128x384xf32>
    %6 = arith.addf %3, %5 : vector<128x384xf32>
    %cst_6 = arith.constant 5.000000e-01 : f32
    %7 = vector.broadcast %cst_6 : f32 to vector<128x384xf32>
    %8 = arith.mulf %7, %6 : vector<128x384xf32>
    %cst_7 = arith.constant 0.707106769 : f32
    %9 = vector.broadcast %cst_7 : f32 to vector<128x384xf32>
    %10 = arith.mulf %6, %9 : vector<128x384xf32>
    %11 = math.erf %10 : vector<128x384xf32>
    %cst_8 = arith.constant 1.000000e+00 : f32
    %12 = vector.broadcast %cst_8 : f32 to vector<128x384xf32>
    %13 = arith.addf %12, %11 : vector<128x384xf32>
    %14 = arith.mulf %8, %13 : vector<128x384xf32>
    %c0_9 = arith.constant 0 : index
    %c0_10 = arith.constant 0 : index
    %15 = vector.load %arg4[%c0_9, %c0_10] : memref<384x128xf32, #tpu.memory_space<vmem>>, vector<384x128xf32>
    %cst_11 = arith.constant dense<0.000000e+00> : vector<128x128xf32>
    %16 = tpu.matmul %14, %15, %cst_11 {dimension_numbers = #tpu.dot_dimension_numbers<[1], [0], [0], [1], [0, 0, 1, 1], [], []>} : vector<128x384xf32>, vector<384x128xf32>, vector<128x128xf32> -> vector<128x128xf32>
    %17 = arith.addf %1, %16 : vector<128x128xf32>
    %c0_12 = arith.constant 0 : index
    %c0_13 = arith.constant 0 : index
    %18 = vector.load %arg5[%c0_12, %c0_13] : memref<1x128xf32, #tpu.memory_space<vmem>>, vector<1x128xf32>
    %19 = vector.broadcast %18 : vector<1x128xf32> to vector<128x128xf32>
    %20 = arith.addf %17, %19 : vector<128x128xf32>
    %c0_14 = arith.constant 0 : index
    %c0_15 = arith.constant 0 : index
    %21 = vector.load %arg6[%c0_14, %c0_15] : memref<128x128xf32, #tpu.memory_space<vmem>>, vector<128x128xf32>
    tpu.vector_store %arg6[%c0_14, %c0_15], %20 {strides = array<i32>} : memref<128x128xf32, #tpu.memory_space<vmem>>, vector<128x128xf32>,
    return
  }
  func.func @transform_0(%arg0: i32) -> (i32, i32) {
    %c0_i32 = arith.constant 0 : i32
    %c0_i32_0 = arith.constant 0 : i32
    return %arg0, %c0_i32 : i32, i32
  }
  func.func @transform_1(%arg0: i32) -> (i32, i32) {
    %c0_i32 = arith.constant 0 : i32
    %c0_i32_0 = arith.constant 0 : i32
    %c0_i32_1 = arith.constant 0 : i32
    return %c0_i32, %c0_i32_0 : i32, i32
  }
  func.func @transform_2(%arg0: i32) -> (i32, i32) {
    %c0_i32 = arith.constant 0 : i32
    %c0_i32_0 = arith.constant 0 : i32
    %c0_i32_1 = arith.constant 0 : i32
    return %c0_i32, %c0_i32_0 : i32, i32
  }
  func.func @transform_3(%arg0: i32) -> (i32, i32) {
    %c0_i32 = arith.constant 0 : i32
    %c0_i32_0 = arith.constant 0 : i32
    %c0_i32_1 = arith.constant 0 : i32
    return %c0_i32, %c0_i32_0 : i32, i32
  }
  func.func @transform_4(%arg0: i32) -> (i32, i32) {
    %c0_i32 = arith.constant 0 : i32
    %c0_i32_0 = arith.constant 0 : i32
    %c0_i32_1 = arith.constant 0 : i32
    return %c0_i32, %c0_i32_0 : i32, i32
  }
  func.func @transform_5(%arg0: i32) -> (i32, i32) {
    %c0_i32 = arith.constant 0 : i32
    %c0_i32_0 = arith.constant 0 : i32
    return %arg0, %c0_i32 : i32, i32
  }
}

</mosaic_0001>

<llo_original>
// kernel: tpu_custom_call.1
$region0: #{tpu_custom_call.1}
  #allocation0 [shape = 'u32[]', space=smem, size = 0x4, offset = 0x4, fixed_abs, tag = 'smem constant byte address 0x4 - core index']
  #allocation1 [shape = 'u32[144,128]{1,0:T(1,128)}', space=vmem, size = 0x12000, scoped, tag = 'internal scratch']
  %s0 = inlined_call_operand.hbm [shape: f32[256,128], index: 0, kind: input, shape index: {}]
  %s1 = inlined_call_operand.hbm [shape: f32[128,384], index: 1, kind: input, shape index: {}]
  %s2 = inlined_call_operand.vmem [shape: f32[1,384], index: 2, kind: input, shape index: {}]
  %s3 = inlined_call_operand.hbm [shape: f32[384,128], index: 3, kind: input, shape index: {}]
  %s4 = inlined_call_operand.vmem [shape: f32[1,128], index: 4, kind: input, shape index: {}]
  %s5 = inlined_call_operand.hbm [shape: f32[256,128], index: 5, kind: output, shape index: {}]
  %s6 = sld [smem:[#allocation0]]
  $region65: #{tpu_custom_call.1} parent=0
    _
  %s8 = ssub.s32 1, %s6
  %s9 = scalar_select 0, %s8, %s6
  $region1: #{tpu_custom_call.1} parent=0
    #allocation2 [shape = 'u8[131072]{0}', space=vmem, size = 0x20000, scoped, tag = 'input window, operand 0']
    #allocation3 [shape = 's32[2]{0}', space=sflag, size = 0x8, scoped, tag = 'scoped memory for tpu_custom_call.1']
    #allocation4 [shape = 's32[2]{0}', space=sflag, size = 0x8, scoped, tag = 'scoped memory for tpu_custom_call.1']
    #allocation5 [shape = 'u8[196608]{0}', space=vmem, size = 0x30000, scoped, tag = 'input window, operand 1, single buffered']
    #allocation6 [shape = 's32[1]{0}', space=sflag, size = 0x4, scoped, tag = 'scoped memory for tpu_custom_call.1']
    #allocation7 [shape = 'u8[196608]{0}', space=vmem, size = 0x30000, scoped, tag = 'input window, operand 3, single buffered']
    #allocation8 [shape = 'u8[131072]{0}', space=vmem, size = 0x20000, scoped, tag = 'output window, operand 0']
    %10 = vsyncpa [#allocation3], 0
    %s11 = scalar_lea.sflag [#allocation3], 1
    %12 = vsyncpa %s11, 0
    %13 = vsyncpa [#allocation6], 0
    %14 = vsyncpa [#allocation4], 0
    %s15 = scalar_lea.sflag [#allocation4], 1
    %16 = vsyncpa %s15, 0
    loop: start=0, step=1, limit=4
    $region2: #{tpu_custom_call.1} parent=1 // loop_pre_header
      _
    $region3: #{tpu_custom_call.1} parent=1 // loop_header
      %s18 = sphi 0, %s22
      %p19 = scmp.ge.s32.totalorder %s18, 4
      %s28 = sphi 0, %s30
      %s31 = sphi 0, %s28
      %s32 = sphi 0, %s31
      %s48 = sphi 0, %s32
      %s52 = sphi 0, %s52
      %s54 = sphi 0, %s52
      %s55 = sphi 0, %s54
      %s69 = sphi 0, %s55
      %s73 = sphi 0, %s73
      %s75 = sphi 0, %s73
      %s76 = sphi 0, %s75
      %s90 = sphi 0, %s76
      %s94 = sphi 0, %s94
      %s96 = sphi 0, %s94
      %s97 = sphi 0, %s96
      %s111 = sphi 0, %s97
      %s115 = sphi 0, %s115
      %s117 = sphi 0, %s115
      %s118 = sphi 0, %s117
      %s132 = sphi 0, %s118
      %s138 = sphi 0, %s140
      %s141 = sphi 0, %s138
      %s142 = sphi 0, %s141
      %s158 = sphi 0, %s142
    $region4: #{tpu_custom_call.1} parent=1 // loop_header_branch
      %21 = sbr.rel (%p19) target = $region8
    $region5: #{tpu_custom_call.1} parent=1 // loop_body
      %s23 = ssub.s32 %s18, 1
      %s24 = ssub.s32 %s18, 2
      %s25 = sadd.s32 %s18, 1
      %s26 = ssub.s32 %s18, %s25
      %p27 = scmp.eq.s32.totalorder %s26, 0
      %s29 = sadd.s32 %s28, 1
      %s30 = scalar_select %p27, %s28, %s29
      %p33 = pneg %p27
      %p34 = scmp.eq.s32.totalorder %s18, 1
      %p35 = por %p33, %p34
      %p36 = scmp.ne.s32.totalorder %s28, %s31
      %p37 = scmp.eq.s32.totalorder %s18, 0
      %p38 = por %p36, %p37
      %p39 = scmp.ne.s32.totalorder %s28, %s31
      %p40 = scmp.eq.s32.totalorder %s23, 1
      %p41 = por %p39, %p40
      %p42 = scmp.ne.s32.totalorder %s31, %s32
      %p43 = scmp.eq.s32.totalorder %s23, 0
      %p44 = por %p42, %p43
      %p45 = scmp.ne.s32.totalorder %s31, %s32
      %p46 = scmp.eq.s32.totalorder %s24, 1
      %p47 = por %p45, %p46
      %p49 = scmp.ne.s32.totalorder %s32, %s48
      %p50 = scmp.eq.s32.totalorder %s24, 0
      %p51 = por %p49, %p50
      %s53 = sadd.s32 %s52, 1
      %p56 = scmp.eq.s32.totalorder %s18, 1
      %p57 = scmp.ne.s32.totalorder %s52, %s54
      %p58 = scmp.eq.s32.totalorder %s18, 0
      %p59 = por %p57, %p58
      %p60 = scmp.ne.s32.totalorder %s52, %s54
      %p61 = scmp.eq.s32.totalorder %s23, 1
      %p62 = por %p60, %p61
      %p63 = scmp.ne.s32.totalorder %s54, %s55
      %p64 = scmp.eq.s32.totalorder %s23, 0
      %p65 = por %p63, %p64
      %p66 = scmp.ne.s32.totalorder %s54, %s55
      %p67 = scmp.eq.s32.totalorder %s24, 1
      %p68 = por %p66, %p67
      %p70 = scmp.ne.s32.totalorder %s55, %s69
      %p71 = scmp.eq.s32.totalorder %s24, 0
      %p72 = por %p70, %p71
      %s74 = sadd.s32 %s73, 1
      %p77 = scmp.eq.s32.totalorder %s18, 1
      %p78 = scmp.ne.s32.totalorder %s73, %s75
      %p79 = scmp.eq.s32.totalorder %s18, 0
      %p80 = por %p78, %p79
      %p81 = scmp.ne.s32.totalorder %s73, %s75
      %p82 = scmp.eq.s32.totalorder %s23, 1
      %p83 = por %p81, %p82
      %p84 = scmp.ne.s32.totalorder %s75, %s76
      %p85 = scmp.eq.s32.totalorder %s23, 0
      %p86 = por %p84, %p85
      %p87 = scmp.ne.s32.totalorder %s75, %s76
      %p88 = scmp.eq.s32.totalorder %s24, 1
      %p89 = por %p87, %p88
      %p91 = scmp.ne.s32.totalorder %s76, %s90
      %p92 = scmp.eq.s32.totalorder %s24, 0
      %p93 = por %p91, %p92
      %s95 = sadd.s32 %s94, 1
      %p98 = scmp.eq.s32.totalorder %s18, 1
      %p99 = scmp.ne.s32.totalorder %s94, %s96
      %p100 = scmp.eq.s32.totalorder %s18, 0
      %p101 = por %p99, %p100
      %p102 = scmp.ne.s32.totalorder %s94, %s96
      %p103 = scmp.eq.s32.totalorder %s23, 1
      %p104 = por %p102, %p103
      %p105 = scmp.ne.s32.totalorder %s96, %s97
      %p106 = scmp.eq.s32.totalorder %s23, 0
      %p107 = por %p105, %p106
      %p108 = scmp.ne.s32.totalorder %s96, %s97
      %p109 = scmp.eq.s32.totalorder %s24, 1
      %p110 = por %p108, %p109
      %p112 = scmp.ne.s32.totalorder %s97, %s111
      %p113 = scmp.eq.s32.totalorder %s24, 0
      %p114 = por %p112, %p113
      %s116 = sadd.s32 %s115, 1
      %p119 = scmp.eq.s32.totalorder %s18, 1
      %p120 = scmp.ne.s32.totalorder %s115, %s117
      %p121 = scmp.eq.s32.totalorder %s18, 0
      %p122 = por %p120, %p121
      %p123 = scmp.ne.s32.totalorder %s115, %s117
      %p124 = scmp.eq.s32.totalorder %s23, 1
      %p125 = por %p123, %p124
      %p126 = scmp.ne.s32.totalorder %s117, %s118
      %p127 = scmp.eq.s32.totalorder %s23, 0
      %p128 = por %p126, %p127
      %p129 = scmp.ne.s32.totalorder %s117, %s118
      %p130 = scmp.eq.s32.totalorder %s24, 1
      %p131 = por %p129, %p130
      %p133 = scmp.ne.s32.totalorder %s118, %s132
      %p134 = scmp.eq.s32.totalorder %s24, 0
      %p135 = por %p133, %p134
      %s136 = ssub.s32 %s18, %s25
      %p137 = scmp.eq.s32.totalorder %s136, 0
      %s139 = sadd.s32 %s138, 1
      %s140 = scalar_select %p137, %s138, %s139
      %p143 = pneg %p137
      %p144 = scmp.eq.s32.totalorder %s18, 1
      %p145 = por %p143, %p144
      %p146 = scmp.ne.s32.totalorder %s138, %s141
      %p147 = scmp.eq.s32.totalorder %s18, 0
      %p148 = por %p146, %p147
      %p149 = scmp.ne.s32.totalorder %s138, %s141
      %p150 = scmp.eq.s32.totalorder %s23, 1
      %p151 = por %p149, %p150
      %p152 = scmp.ne.s32.totalorder %s141, %s142
      %p153 = scmp.eq.s32.totalorder %s23, 0
      %p154 = por %p152, %p153
      %p155 = scmp.ne.s32.totalorder %s141, %s142
      %p156 = scmp.eq.s32.totalorder %s24, 1
      %p157 = por %p155, %p156
      %p159 = scmp.ne.s32.totalorder %s142, %s158
      %p160 = scmp.eq.s32.totalorder %s24, 0
      %p161 = por %p159, %p160
      %p162 = scmp.le.s32.totalorder 1, %s18
      %p163 = scmp.lt.s32.totalorder %s18, 3
      %p164 = pnand %p162, %p163
      %p165 = pneg %p164
      // Predicated region
      $region9: #{tpu_custom_call.1} parent=5 // pred_check
        _
      $region10: #{tpu_custom_call.1} parent=5 // pred_check_branch
        %167 = sbr.rel (%p164) target = $region12
      $region11: #{tpu_custom_call.1} parent=5 // pred_region
        %s168 = ssub.s32 %s18, 1
        // Predicated region
        $region13: #{tpu_custom_call.1} parent=11 // pred_check
          %p169 = pneg %p65
        $region14: #{tpu_custom_call.1} parent=11 // pred_check_branch
          %171 = sbr.rel (%p169) target = $region16
        $region15: #{tpu_custom_call.1} parent=11 // pred_region
          %s173 = ssub.s32 6144, 6144
          %174 = vsyncadd [#allocation6], %s173
          %s175 = sshll.u32 [#allocation5], 4
          %s176 = int_to_ptr.vmem [resolvable:$true] %s175
          %181 = dma.hbm_to_vmem [thread:$0]  %s1, 6144, %s176, [#allocation6], 384, 384, 24
        $region16: #{tpu_custom_call.1} parent=11 // pred_fallthru
          _
        // Predicated region
        $region17: #{tpu_custom_call.1} parent=11 // pred_check
          %p182 = pneg %p86
        $region18: #{tpu_custom_call.1} parent=11 // pred_check_branch
          %184 = sbr.rel (%p182) target = $region20
        $region19: #{tpu_custom_call.1} parent=11 // pred_region
          _
        $region20: #{tpu_custom_call.1} parent=11 // pred_fallthru
          _
        // Predicated region
        $region21: #{tpu_custom_call.1} parent=11 // pred_check
          %p185 = pneg %p107
        $region22: #{tpu_custom_call.1} parent=11 // pred_check_branch
          %187 = sbr.rel (%p185) target = $region24
        $region23: #{tpu_custom_call.1} parent=11 // pred_region
          %s189 = ssub.s32 6144, 6144
          %190 = vsyncadd [#allocation6], %s189
          %s191 = sshll.u32 [#allocation7], 4
          %s192 = int_to_ptr.vmem [resolvable:$true] %s191
          %197 = dma.hbm_to_vmem [thread:$0]  %s3, 6144, %s192, [#allocation6], 128, 128, 8
        $region24: #{tpu_custom_call.1} parent=11 // pred_fallthru
          _
        // Predicated region
        $region25: #{tpu_custom_call.1} parent=11 // pred_check
          %p198 = pneg %p128
        $region26: #{tpu_custom_call.1} parent=11 // pred_check_branch
          %200 = sbr.rel (%p198) target = $region28
        $region27: #{tpu_custom_call.1} parent=11 // pred_region
          _
        $region28: #{tpu_custom_call.1} parent=11 // pred_fallthru
          _
      $region12: #{tpu_custom_call.1} parent=5 // pred_fallthru
        _
      %p201 = scmp.lt.s32.totalorder %s18, 2
      // Predicated region
      $region29: #{tpu_custom_call.1} parent=5 // pred_check
        %p202 = pneg %p201
      $region30: #{tpu_custom_call.1} parent=5 // pred_check_branch
        %204 = sbr.rel (%p202) target = $region32
      $region31: #{tpu_custom_call.1} parent=5 // pred_region
        // Predicated region
        $region33: #{tpu_custom_call.1} parent=31 // pred_check
          %p205 = pneg %p38
        $region34: #{tpu_custom_call.1} parent=31 // pred_check_branch
          %207 = sbr.rel (%p205) target = $region36
        $region35: #{tpu_custom_call.1} parent=31 // pred_region
          %s208 = sand.u32 %s28, 1
          %s209 = scalar_lea.sflag [#allocation3], %s208
          %s210 = sand.u32 %s28, 1
          %s211 = smul.addr %s210, 128
          %s212 = scalar_lea.vmem [#allocation2], %s211
          %s213 = smul.u32 16, %s18
          %s215 = ssub.s32 2048, 2048
          %216 = vsyncadd %s209, %s215
          %s217 = smul.addr %s213, 128
          %s218 = scalar_lea.hbm %s0, %s217
          %s219 = sshll.u32 %s212, 4
          %s220 = int_to_ptr.vmem [resolvable:$true] %s219
          %225 = dma.hbm_to_vmem [thread:$0]  %s218, 2048, %s220, %s209, 128, 128, 8
        $region36: #{tpu_custom_call.1} parent=31 // pred_fallthru
          _
      $region32: #{tpu_custom_call.1} parent=5 // pred_fallthru
        _
      %p226 = scmp.le.s32.totalorder 1, %s18
      %p227 = scmp.lt.s32.totalorder %s18, 3
      %p228 = pnand %p226, %p227
      %p229 = pneg %p228
      // Predicated region
      $region37: #{tpu_custom_call.1} parent=5 // pred_check
        _
      $region38: #{tpu_custom_call.1} parent=5 // pred_check_branch
        %231 = sbr.rel (%p228) target = $region40
      $region39: #{tpu_custom_call.1} parent=5 // pred_region
        %s232 = ssub.s32 %s18, 1
        %s233 = sand.u32 %s31, 1
        %s234 = scalar_lea.sflag [#allocation3], %s233
        %s235 = sand.u32 %s31, 1
        %s236 = smul.addr %s235, 128
        %s237 = scalar_lea.vmem [#allocation2], %s236
        // Predicated region
        $region41: #{tpu_custom_call.1} parent=39 // pred_check
          %p238 = pneg %p44
        $region42: #{tpu_custom_call.1} parent=39 // pred_check_branch
          %240 = sbr.rel (%p238) target = $region44
        $region43: #{tpu_custom_call.1} parent=39 // pred_region
          %241 = dma.done %s234, 2048
        $region44: #{tpu_custom_call.1} parent=39 // pred_fallthru
          _
        // Predicated region
        $region45: #{tpu_custom_call.1} parent=39 // pred_check
          %p242 = pneg %p65
        $region46: #{tpu_custom_call.1} parent=39 // pred_check_branch
          %244 = sbr.rel (%p242) target = $region48
        $region47: #{tpu_custom_call.1} parent=39 // pred_region
          %245 = dma.done [#allocation6], 6144
        $region48: #{tpu_custom_call.1} parent=39 // pred_fallthru
          _
        // Predicated region
        $region49: #{tpu_custom_call.1} parent=39 // pred_check
          %p246 = pneg %p107
        $region50: #{tpu_custom_call.1} parent=39 // pred_check_branch
          %248 = sbr.rel (%p246) target = $region52
        $region51: #{tpu_custom_call.1} parent=39 // pred_region
          %249 = dma.done [#allocation6], 6144
        $region52: #{tpu_custom_call.1} parent=39 // pred_fallthru
          _
        %s250 = sand.u32 %s31, 1
        %s251 = scalar_lea.sflag [#allocation3], %s250
        %s252 = sand.u32 %s31, 1
        %s253 = smul.addr %s252, 128
        %s254 = scalar_lea.vmem [#allocation2], %s253
        %p255 = pneg %p44
        %p256 = pneg %p41
        %p257 = pneg %p65
        %p258 = pneg %p62
        %p259 = pneg %p86
        %p260 = pneg %p83
        %p261 = pneg %p107
        %p262 = pneg %p104
        %p263 = pneg %p128
        %p264 = pneg %p125
        %p265 = pneg %p154
        %p266 = pneg %p151
        %s267 = sand.u32 %s141, 1
        %s268 = scalar_lea.sflag [#allocation4], %s267
        %s269 = sand.u32 %s141, 1
        %s270 = smul.addr %s269, 128
        %s271 = scalar_lea.vmem [#allocation8], %s270
        %s272 = smul.u32 16, %s23
        %s273 = smul.u32 16, %s23
        %v274 = vld [vmem:[%s237] sm:$0xff]
        %v275 = vld [vmem:[%s237 + $0x8] sm:$0xff]
        %v276 = vld [vmem:[%s237 + $0x10] sm:$0xff]
        %v277 = vld [vmem:[%s237 + $0x18] sm:$0xff]
        %v278 = vld [vmem:[%s237 + $0x20] sm:$0xff]
        %v279 = vld [vmem:[%s237 + $0x28] sm:$0xff]
        %v280 = vld [vmem:[%s237 + $0x30] sm:$0xff]
        %v281 = vld [vmem:[%s237 + $0x38] sm:$0xff]
        %v282 = vld [vmem:[%s237 + $0x40] sm:$0xff]
        %v283 = vld [vmem:[%s237 + $0x48] sm:$0xff]
        %v284 = vld [vmem:[%s237 + $0x50] sm:$0xff]
        %v285 = vld [vmem:[%s237 + $0x58] sm:$0xff]
        %v286 = vld [vmem:[%s237 + $0x60] sm:$0xff]
        %v287 = vld [vmem:[%s237 + $0x68] sm:$0xff]
        %v288 = vld [vmem:[%s237 + $0x70] sm:$0xff]
        %v289 = vld [vmem:[%s237 + $0x78] sm:$0xff]
        %v290 = vld [vmem:[#allocation5] sm:$0xff]
        %v291 = vld [vmem:[#allocation5 + $0x8] sm:$0xff]
        %v292 = vld [vmem:[#allocation5 + $0x10] sm:$0xff]
        %v293 = vld [vmem:[#allocation5 + $0x18] sm:$0xff]
        %v294 = vld [vmem:[#allocation5 + $0x20] sm:$0xff]
        %v295 = vld [vmem:[#allocation5 + $0x28] sm:$0xff]
        %v296 = vld [vmem:[#allocation5 + $0x30] sm:$0xff]
        %v297 = vld [vmem:[#allocation5 + $0x38] sm:$0xff]
        %v298 = vld [vmem:[#allocation5 + $0x40] sm:$0xff]
        %v299 = vld [vmem:[#allocation5 + $0x48] sm:$0xff]
        %v300 = vld [vmem:[#allocation5 + $0x50] sm:$0xff]
        %v301 = vld [vmem:[#allocation5 + $0x58] sm:$0xff]
        %v302 = vld [vmem:[#allocation5 + $0x60] sm:$0xff]
        %v303 = vld [vmem:[#allocation5 + $0x68] sm:$0xff]
        %v304 = vld [vmem:[#allocation5 + $0x70] sm:$0xff]
        %v305 = vld [vmem:[#allocation5 + $0x78] sm:$0xff]
        %v306 = vld [vmem:[#allocation5 + $0x80] sm:$0xff]
        %v307 = vld [vmem:[#allocation5 + $0x88] sm:$0xff]
        %v308 = vld [vmem:[#allocation5 + $0x90] sm:$0xff]
        %v309 = vld [vmem:[#allocation5 + $0x98] sm:$0xff]
        %v310 = vld [vmem:[#allocation5 + $0xa0] sm:$0xff]
        %v311 = vld [vmem:[#allocation5 + $0xa8] sm:$0xff]
        %v312 = vld [vmem:[#allocation5 + $0xb0] sm:$0xff]
        %v313 = vld [vmem:[#allocation5 + $0xb8] sm:$0xff]
        %v314 = vld [vmem:[#allocation5 + $0xc0] sm:$0xff]
        %v315 = vld [vmem:[#allocation5 + $0xc8] sm:$0xff]
        %v316 = vld [vmem:[#allocation5 + $0xd0] sm:$0xff]
        %v317 = vld [vmem:[#allocation5 + $0xd8] sm:$0xff]
        %v318 = vld [vmem:[#allocation5 + $0xe0] sm:$0xff]
        %v319 = vld [vmem:[#allocation5 + $0xe8] sm:$0xff]
        %v320 = vld [vmem:[#allocation5 + $0xf0] sm:$0xff]
        %v321 = vld [vmem:[#allocation5 + $0xf8] sm:$0xff]
        %v322 = vld [vmem:[#allocation5 + $0x100] sm:$0xff]
        %v323 = vld [vmem:[#allocation5 + $0x108] sm:$0xff]
        %v324 = vld [vmem:[#allocation5 + $0x110] sm:$0xff]
        %v325 = vld [vmem:[#allocation5 + $0x118] sm:$0xff]
        %v326 = vld [vmem:[#allocation5 + $0x120] sm:$0xff]
        %v327 = vld [vmem:[#allocation5 + $0x128] sm:$0xff]
        %v328 = vld [vmem:[#allocation5 + $0x130] sm:$0xff]
        %v329 = vld [vmem:[#allocation5 + $0x138] sm:$0xff]
        %v330 = vld [vmem:[#allocation5 + $0x140] sm:$0xff]
        %v331 = vld [vmem:[#allocation5 + $0x148] sm:$0xff]
        %v332 = vld [vmem:[#allocation5 + $0x150] sm:$0xff]
        %v333 = vld [vmem:[#allocation5 + $0x158] sm:$0xff]
        %v334 = vld [vmem:[#allocation5 + $0x160] sm:$0xff]
        %v335 = vld [vmem:[#allocation5 + $0x168] sm:$0xff]
        %v336 = vld [vmem:[#allocation5 + $0x170] sm:$0xff]
        %v337 = vld [vmem:[#allocation5 + $0x178] sm:$0xff]
        %v338 = vld [vmem:[%s2] sm:$0x7]
        %v340 = vlaneseq
        %v341 = vshrl.u32 %v340, 7
        %v342 = vsub.s32 0, %v341
        %v343 = vrot.slane %v338, %v342
        %v344 = vlaneseq
        %v345 = vshrl.u32 %v344, 7
        %v346 = vsub.s32 1, %v345
        %v347 = vrot.slane %v338, %v346
        %v348 = vlaneseq
        %v349 = vshrl.u32 %v348, 7
        %v350 = vsub.s32 2, %v349
        %v351 = vrot.slane %v338, %v350
        %355 = vmatprep.subr.mxu0 %v336
        %356 = vmatpush1.msra.mxu0 %v335
        %357 = vmatprep.subr.mxu0 %v333
        %358 = vmatpush1.msra.mxu0 %v332
        %359 = vmatprep.subr.mxu0 %v330
        %360 = vmatpush1.msra.mxu0 %v329
        %361 = vmatprep.subr.mxu0 %v327
        %362 = vmatpush1.msra.mxu0 %v326
        %363 = vmatprep.subr.mxu0 %v324
        %364 = vmatpush1.msra.mxu0 %v323
        %365 = vmatprep.subr.mxu0 %v321
        %366 = vmatpush1.msra.mxu0 %v320
        %367 = vmatprep.subr.mxu0 %v318
        %368 = vmatpush1.msra.mxu0 %v317
        %369 = vmatprep.subr.mxu0 %v315
        %370 = vmatpush1.msra.mxu0 %v314
        %371 = vmatprep.subr.mxu0 %v312
        %372 = vmatpush1.msra.mxu0 %v311
        %373 = vmatprep.subr.mxu0 %v309
        %374 = vmatpush1.msra.mxu0 %v308
        %375 = vmatprep.subr.mxu0 %v306
        %376 = vmatpush1.msra.mxu0 %v305
        %377 = vmatprep.subr.mxu0 %v303
        %378 = vmatpush1.msra.mxu0 %v302
        %379 = vmatprep.subr.mxu0 %v300
        %380 = vmatpush1.msra.mxu0 %v299
        %381 = vmatprep.subr.mxu0 %v297
        %382 = vmatpush1.msra.mxu0 %v296
        %383 = vmatprep.subr.mxu0 %v294
        %384 = vmatpush1.msra.mxu0 %v293
        %385 = vmatprep.subr.mxu0 %v291
        %386 = vmatpush1.msra.mxu0 %v290
        %387 = vmatprep.subr.mxu0 0.0
        %388 = vmatpush2.msra.mxu0 0.0
        %389 = vmatprep.subr.mxu0 0.0
        %390 = vmatpush2.msra.mxu0 0.0
        %391 = vmatprep.subr.mxu0 0.0
        %392 = vmatpush2.msra.mxu0 0.0
        %393 = vmatprep.subr.mxu0 0.0
        %394 = vmatpush2.msra.mxu0 0.0
        %395 = vmatprep.subr.mxu0 0.0
        %396 = vmatpush2.msra.mxu0 0.0
        %397 = vmatprep.subr.mxu0 0.0
        %398 = vmatpush2.msra.mxu0 0.0
        %399 = vmatprep.subr.mxu0 0.0
        %400 = vmatpush2.msra.mxu0 0.0
        %401 = vmatprep.subr.mxu0 0.0
        %402 = vmatpush2.msra.mxu0 0.0
        %403 = vmatprep.subr.mxu0 0.0
        %404 = vmatpush2.msra.mxu0 0.0
        %405 = vmatprep.subr.mxu0 0.0
        %406 = vmatpush2.msra.mxu0 0.0
        %407 = vmatprep.subr.mxu0 0.0
        %408 = vmatpush2.msra.mxu0 0.0
        %409 = vmatprep.subr.mxu0 0.0
        %410 = vmatpush2.msra.mxu0 0.0
        %411 = vmatprep.subr.mxu0 0.0
        %412 = vmatpush2.msra.mxu0 0.0
        %413 = vmatprep.subr.mxu0 0.0
        %414 = vmatpush2.msra.mxu0 0.0
        %415 = vmatprep.subr.mxu0 0.0
        %416 = vmatpush2.msra.mxu0 0.0
        %417 = vmatprep.subr.mxu0 0.0
        %418 = vmatpush2.msra.mxu0 0.0
        %419 = vmatprep.mubr.f32.mxu0 0.0
        %420 = vmatmul.mubr.f32.gmra.mxu0 %v274
        %v421 = vpop.f32.mrf.mxu0
        %v422 = vadd.f32 %v343, %v421
        %v423 = vpop.f32.mrf.mxu0
        %v424 = vadd.f32 %v347, %v423
        %425 = vmatprep.mubr.f32.mxu0 0.0
        %426 = vmatmul.mubr.f32.gmra.mxu0 %v275
        %v427 = vpop.f32.mrf.mxu0
        %v428 = vadd.f32 %v343, %v427
        %v429 = vpop.f32.mrf.mxu0
        %v430 = vadd.f32 %v347, %v429
        %431 = vmatprep.mubr.f32.mxu0 0.0
        %432 = vmatmul.mubr.f32.gmra.mxu0 %v276
        %v433 = vpop.f32.mrf.mxu0
        %v434 = vadd.f32 %v343, %v433
        %v435 = vpop.f32.mrf.mxu0
        %v436 = vadd.f32 %v347, %v435
        %437 = vmatprep.mubr.f32.mxu0 0.0
        %438 = vmatmul.mubr.f32.gmra.mxu0 %v277
        %v439 = vpop.f32.mrf.mxu0
        %v440 = vadd.f32 %v343, %v439
        %v441 = vpop.f32.mrf.mxu0
        %v442 = vadd.f32 %v347, %v441
        %443 = vmatprep.mubr.f32.mxu0 0.0
        %444 = vmatmul.mubr.f32.gmra.mxu0 %v278
        %v445 = vpop.f32.mrf.mxu0
        %v446 = vadd.f32 %v343, %v445
        %v447 = vpop.f32.mrf.mxu0
        %v448 = vadd.f32 %v347, %v447
        %449 = vmatprep.mubr.f32.mxu0 0.0
        %450 = vmatmul.mubr.f32.gmra.mxu0 %v279
        %v451 = vpop.f32.mrf.mxu0
        %v452 = vadd.f32 %v343, %v451
        %v453 = vpop.f32.mrf.mxu0
        %v454 = vadd.f32 %v347, %v453
        %455 = vmatprep.mubr.f32.mxu0 0.0
        %456 = vmatmul.mubr.f32.gmra.mxu0 %v280
        %v457 = vpop.f32.mrf.mxu0
        %v458 = vadd.f32 %v343, %v457
        %v459 = vpop.f32.mrf.mxu0
        %v460 = vadd.f32 %v347, %v459
        %461 = vmatprep.mubr.f32.mxu0 0.0
        %462 = vmatmul.mubr.f32.gmra.mxu0 %v281
        %v463 = vpop.f32.mrf.mxu0
        %v464 = vadd.f32 %v343, %v463
        %v465 = vpop.f32.mrf.mxu0
        %v466 = vadd.f32 %v347, %v465
        %467 = vmatprep.mubr.f32.mxu0 0.0
        %468 = vmatmul.mubr.f32.gmra.mxu0 %v282
        %v469 = vpop.f32.mrf.mxu0
        %v470 = vadd.f32 %v343, %v469
        %v471 = vpop.f32.mrf.mxu0
        %v472 = vadd.f32 %v347, %v471
        %473 = vmatprep.mubr.f32.mxu0 0.0
        %474 = vmatmul.mubr.f32.gmra.mxu0 %v283
        %v475 = vpop.f32.mrf.mxu0
        %v476 = vadd.f32 %v343, %v475
        %v477 = vpop.f32.mrf.mxu0
        %v478 = vadd.f32 %v347, %v477
        %479 = vmatprep.mubr.f32.mxu0 0.0
        %480 = vmatmul.mubr.f32.gmra.mxu0 %v284
        %v481 = vpop.f32.mrf.mxu0
        %v482 = vadd.f32 %v343, %v481
        %v483 = vpop.f32.mrf.mxu0
        %v484 = vadd.f32 %v347, %v483
        %485 = vmatprep.mubr.f32.mxu0 0.0
        %486 = vmatmul.mubr.f32.gmra.mxu0 %v285
        %v487 = vpop.f32.mrf.mxu0
        %v488 = vadd.f32 %v343, %v487
        %v489 = vpop.f32.mrf.mxu0
        %v490 = vadd.f32 %v347, %v489
        %491 = vmatprep.mubr.f32.mxu0 0.0
        %492 = vmatmul.mubr.f32.gmra.mxu0 %v286
        %v493 = vpop.f32.mrf.mxu0
        %v494 = vadd.f32 %v343, %v493
        %v495 = vpop.f32.mrf.mxu0
        %v496 = vadd.f32 %v347, %v495
        %497 = vmatprep.mubr.f32.mxu0 0.0
        %498 = vmatmul.mubr.f32.gmra.mxu0 %v287
        %v499 = vpop.f32.mrf.mxu0
        %v500 = vadd.f32 %v343, %v499
        %v501 = vpop.f32.mrf.mxu0
        %v502 = vadd.f32 %v347, %v501
        %503 = vmatprep.mubr.f32.mxu0 0.0
        %504 = vmatmul.mubr.f32.gmra.mxu0 %v288
        %v505 = vpop.f32.mrf.mxu0
        %v506 = vadd.f32 %v343, %v505
        %v507 = vpop.f32.mrf.mxu0
        %v508 = vadd.f32 %v347, %v507
        %509 = vmatprep.mubr.f32.mxu0 0.0
        %510 = vmatmul.mubr.f32.gmra.mxu0 %v289
        %v511 = vpop.f32.mrf.mxu0
        %v512 = vadd.f32 %v343, %v511
        %v513 = vpop.f32.mrf.mxu0
        %v514 = vadd.f32 %v347, %v513
        %515 = vdwg.mxu0
        %516 = vmatprep.subr.mxu0 0.0
        %517 = vmatpush1.msra.mxu0 %v337
        %518 = vmatprep.subr.mxu0 0.0
        %519 = vmatpush1.msra.mxu0 %v334
        %520 = vmatprep.subr.mxu0 0.0
        %521 = vmatpush1.msra.mxu0 %v331
        %522 = vmatprep.subr.mxu0 0.0
        %523 = vmatpush1.msra.mxu0 %v328
        %524 = vmatprep.subr.mxu0 0.0
        %525 = vmatpush1.msra.mxu0 %v325
        %526 = vmatprep.subr.mxu0 0.0
        %527 = vmatpush1.msra.mxu0 %v322
        %528 = vmatprep.subr.mxu0 0.0
        %529 = vmatpush1.msra.mxu0 %v319
        %530 = vmatprep.subr.mxu0 0.0
        %531 = vmatpush1.msra.mxu0 %v316
        %532 = vmatprep.subr.mxu0 0.0
        %533 = vmatpush1.msra.mxu0 %v313
        %534 = vmatprep.subr.mxu0 0.0
        %535 = vmatpush1.msra.mxu0 %v310
        %536 = vmatprep.subr.mxu0 0.0
        %537 = vmatpush1.msra.mxu0 %v307
        %538 = vmatprep.subr.mxu0 0.0
        %539 = vmatpush1.msra.mxu0 %v304
        %540 = vmatprep.subr.mxu0 0.0
        %541 = vmatpush1.msra.mxu0 %v301
        %542 = vmatprep.subr.mxu0 0.0
        %543 = vmatpush1.msra.mxu0 %v298
        %544 = vmatprep.subr.mxu0 0.0
        %545 = vmatpush1.msra.mxu0 %v295
        %546 = vmatprep.subr.mxu0 0.0
        %547 = vmatpush1.msra.mxu0 %v292
        %548 = vmatprep.subr.mxu0 0.0
        %549 = vmatpush2.msra.mxu0 0.0
        %550 = vmatprep.subr.mxu0 0.0
        %551 = vmatpush2.msra.mxu0 0.0
        %552 = vmatprep.subr.mxu0 0.0
        %553 = vmatpush2.msra.mxu0 0.0
        %554 = vmatprep.subr.mxu0 0.0
        %555 = vmatpush2.msra.mxu0 0.0
        %556 = vmatprep.subr.mxu0 0.0
        %557 = vmatpush2.msra.mxu0 0.0
        %558 = vmatprep.subr.mxu0 0.0
        %559 = vmatpush2.msra.mxu0 0.0
        %560 = vmatprep.subr.mxu0 0.0
        %561 = vmatpush2.msra.mxu0 0.0
        %562 = vmatprep.subr.mxu0 0.0
        %563 = vmatpush2.msra.mxu0 0.0
        %564 = vmatprep.subr.mxu0 0.0
        %565 = vmatpush2.msra.mxu0 0.0
        %566 = vmatprep.subr.mxu0 0.0
        %567 = vmatpush2.msra.mxu0 0.0
        %568 = vmatprep.subr.mxu0 0.0
        %569 = vmatpush2.msra.mxu0 0.0
        %570 = vmatprep.subr.mxu0 0.0
        %571 = vmatpush2.msra.mxu0 0.0
        %572 = vmatprep.subr.mxu0 0.0
        %573 = vmatpush2.msra.mxu0 0.0
        %574 = vmatprep.subr.mxu0 0.0
        %575 = vmatpush2.msra.mxu0 0.0
        %576 = vmatprep.subr.mxu0 0.0
        %577 = vmatpush2.msra.mxu0 0.0
        %578 = vmatprep.subr.mxu0 0.0
        %579 = vmatpush2.msra.mxu0 0.0
        %580 = vmatprep.mubr.f32.mxu0 0.0
        %581 = vmatmul.mubr.f32.gmra.mxu0 %v274
        %v582 = vpop.f32.mrf.mxu0
        %v583 = vadd.f32 %v351, %v582
        %v584 = vpop.f32.mrf.mxu0
        %585 = vmatprep.mubr.f32.mxu0 0.0
        %586 = vmatmul.mubr.f32.gmra.mxu0 %v275
        %v587 = vpop.f32.mrf.mxu0
        %v588 = vadd.f32 %v351, %v587
        %v589 = vpop.f32.mrf.mxu0
        %590 = vmatprep.mubr.f32.mxu0 0.0
        %591 = vmatmul.mubr.f32.gmra.mxu0 %v276
        %v592 = vpop.f32.mrf.mxu0
        %v593 = vadd.f32 %v351, %v592
        %v594 = vpop.f32.mrf.mxu0
        %595 = vmatprep.mubr.f32.mxu0 0.0
        %596 = vmatmul.mubr.f32.gmra.mxu0 %v277
        %v597 = vpop.f32.mrf.mxu0
        %v598 = vadd.f32 %v351, %v597
        %v599 = vpop.f32.mrf.mxu0
        %600 = vmatprep.mubr.f32.mxu0 0.0
        %601 = vmatmul.mubr.f32.gmra.mxu0 %v278
        %v602 = vpop.f32.mrf.mxu0
        %v603 = vadd.f32 %v351, %v602
        %v604 = vpop.f32.mrf.mxu0
        %605 = vmatprep.mubr.f32.mxu0 0.0
        %606 = vmatmul.mubr.f32.gmra.mxu0 %v279
        %v607 = vpop.f32.mrf.mxu0
        %v608 = vadd.f32 %v351, %v607
        %v609 = vpop.f32.mrf.mxu0
        %610 = vmatprep.mubr.f32.mxu0 0.0
        %611 = vmatmul.mubr.f32.gmra.mxu0 %v280
        %v612 = vpop.f32.mrf.mxu0
        %v613 = vadd.f32 %v351, %v612
        %v614 = vpop.f32.mrf.mxu0
        %615 = vmatprep.mubr.f32.mxu0 0.0
        %616 = vmatmul.mubr.f32.gmra.mxu0 %v281
        %v617 = vpop.f32.mrf.mxu0
        %v618 = vadd.f32 %v351, %v617
        %v619 = vpop.f32.mrf.mxu0
        %620 = vmatprep.mubr.f32.mxu0 0.0
        %621 = vmatmul.mubr.f32.gmra.mxu0 %v282
        %v622 = vpop.f32.mrf.mxu0
        %v623 = vadd.f32 %v351, %v622
        %v624 = vpop.f32.mrf.mxu0
        %625 = vmatprep.mubr.f32.mxu0 0.0
        %626 = vmatmul.mubr.f32.gmra.mxu0 %v283
        %v627 = vpop.f32.mrf.mxu0
        %v628 = vadd.f32 %v351, %v627
        %v629 = vpop.f32.mrf.mxu0
        %630 = vmatprep.mubr.f32.mxu0 0.0
        %631 = vmatmul.mubr.f32.gmra.mxu0 %v284
        %v632 = vpop.f32.mrf.mxu0
        %v633 = vadd.f32 %v351, %v632
        %v634 = vpop.f32.mrf.mxu0
        %635 = vmatprep.mubr.f32.mxu0 0.0
        %636 = vmatmul.mubr.f32.gmra.mxu0 %v285
        %v637 = vpop.f32.mrf.mxu0
        %v638 = vadd.f32 %v351, %v637
        %v639 = vpop.f32.mrf.mxu0
        %640 = vmatprep.mubr.f32.mxu0 0.0
        %641 = vmatmul.mubr.f32.gmra.mxu0 %v286
        %v642 = vpop.f32.mrf.mxu0
        %v643 = vadd.f32 %v351, %v642
        %v644 = vpop.f32.mrf.mxu0
        %645 = vmatprep.mubr.f32.mxu0 0.0
        %646 = vmatmul.mubr.f32.gmra.mxu0 %v287
        %v647 = vpop.f32.mrf.mxu0
        %v648 = vadd.f32 %v351, %v647
        %v649 = vpop.f32.mrf.mxu0
        %650 = vmatprep.mubr.f32.mxu0 0.0
        %651 = vmatmul.mubr.f32.gmra.mxu0 %v288
        %v652 = vpop.f32.mrf.mxu0
        %v653 = vadd.f32 %v351, %v652
        %v654 = vpop.f32.mrf.mxu0
        %655 = vmatprep.mubr.f32.mxu0 0.0
        %656 = vmatmul.mubr.f32.gmra.mxu0 %v289
        %v657 = vpop.f32.mrf.mxu0
        %v658 = vadd.f32 %v351, %v657
        %v659 = vpop.f32.mrf.mxu0
        %660 = vdwg.mxu0
        %v661 = vmul.f32 %v422, 0.5
        %v662 = vmul.f32 %v424, 0.5
        %v663 = vmul.f32 %v583, 0.5
        %v664 = vmul.f32 %v428, 0.5
        %v665 = vmul.f32 %v430, 0.5
        %v666 = vmul.f32 %v588, 0.5
        %v667 = vmul.f32 %v434, 0.5
        %v668 = vmul.f32 %v436, 0.5
        %v669 = vmul.f32 %v593, 0.5
        %v670 = vmul.f32 %v440, 0.5
        %v671 = vmul.f32 %v442, 0.5
        %v672 = vmul.f32 %v598, 0.5
        %v673 = vmul.f32 %v446, 0.5
        %v674 = vmul.f32 %v448, 0.5
        %v675 = vmul.f32 %v603, 0.5
        %v676 = vmul.f32 %v452, 0.5
        %v677 = vmul.f32 %v454, 0.5
        %v678 = vmul.f32 %v608, 0.5
        %v679 = vmul.f32 %v458, 0.5
        %v680 = vmul.f32 %v460, 0.5
        %v681 = vmul.f32 %v613, 0.5
        %v682 = vmul.f32 %v464, 0.5
        %v683 = vmul.f32 %v466, 0.5
        %v684 = vmul.f32 %v618, 0.5
        %v685 = vmul.f32 %v470, 0.5
        %v686 = vmul.f32 %v472, 0.5
        %v687 = vmul.f32 %v623, 0.5
        %v688 = vmul.f32 %v476, 0.5
        %v689 = vmul.f32 %v478, 0.5
        %v690 = vmul.f32 %v628, 0.5
        %v691 = vmul.f32 %v482, 0.5
        %v692 = vmul.f32 %v484, 0.5
        %v693 = vmul.f32 %v633, 0.5
        %v694 = vmul.f32 %v488, 0.5
        %v695 = vmul.f32 %v490, 0.5
        %v696 = vmul.f32 %v638, 0.5
        %v697 = vmul.f32 %v494, 0.5
        %v698 = vmul.f32 %v496, 0.5
        %v699 = vmul.f32 %v643, 0.5
        %v700 = vmul.f32 %v500, 0.5
        %v701 = vmul.f32 %v502, 0.5
        %v702 = vmul.f32 %v648, 0.5
        %v703 = vmul.f32 %v506, 0.5
        %v704 = vmul.f32 %v508, 0.5
        %v705 = vmul.f32 %v653, 0.5
        %v706 = vmul.f32 %v512, 0.5
        %v707 = vmul.f32 %v514, 0.5
        %v708 = vmul.f32 %v658, 0.5
        %v709 = vmul.f32 %v422, 0.70710677
        %v710 = vmul.f32 %v424, 0.70710677
        %v711 = vmul.f32 %v583, 0.70710677
        %v712 = vmul.f32 %v428, 0.70710677
        %v713 = vmul.f32 %v430, 0.70710677
        %v714 = vmul.f32 %v588, 0.70710677
        %v715 = vmul.f32 %v434, 0.70710677
        %v716 = vmul.f32 %v436, 0.70710677
        %v717 = vmul.f32 %v593, 0.70710677
        %v718 = vmul.f32 %v440, 0.70710677
        %v719 = vmul.f32 %v442, 0.70710677
        %v720 = vmul.f32 %v598, 0.70710677
        %v721 = vmul.f32 %v446, 0.70710677
        %v722 = vmul.f32 %v448, 0.70710677
        %v723 = vmul.f32 %v603, 0.70710677
        %v724 = vmul.f32 %v452, 0.70710677
        %v725 = vmul.f32 %v454, 0.70710677
        %v726 = vmul.f32 %v608, 0.70710677
        %v727 = vmul.f32 %v458, 0.70710677
        %v728 = vmul.f32 %v460, 0.70710677
        %v729 = vmul.f32 %v613, 0.70710677
        %v730 = vmul.f32 %v464, 0.70710677
        %v731 = vmul.f32 %v466, 0.70710677
        %v732 = vmul.f32 %v618, 0.70710677
        %v733 = vmul.f32 %v470, 0.70710677
        %v734 = vmul.f32 %v472, 0.70710677
        %v735 = vmul.f32 %v623, 0.70710677
        %v736 = vmul.f32 %v476, 0.70710677
        %v737 = vmul.f32 %v478, 0.70710677
        %v738 = vmul.f32 %v628, 0.70710677
        %v739 = vmul.f32 %v482, 0.70710677
        %v740 = vmul.f32 %v484, 0.70710677
        %v741 = vmul.f32 %v633, 0.70710677
        %v742 = vmul.f32 %v488, 0.70710677
        %v743 = vmul.f32 %v490, 0.70710677
        %v744 = vmul.f32 %v638, 0.70710677
        %v745 = vmul.f32 %v494, 0.70710677
        %v746 = vmul.f32 %v496, 0.70710677
        %v747 = vmul.f32 %v643, 0.70710677
        %v748 = vmul.f32 %v500, 0.70710677
        %v749 = vmul.f32 %v502, 0.70710677
        %v750 = vmul.f32 %v648, 0.70710677
        %v751 = vmul.f32 %v506, 0.70710677
        %v752 = vmul.f32 %v508, 0.70710677
        %v753 = vmul.f32 %v653, 0.70710677
        %v754 = vmul.f32 %v512, 0.70710677
        %v755 = vmul.f32 %v514, 0.70710677
        %v756 = vmul.f32 %v658, 0.70710677
        %v757 = verf.f32.pop %v709
        %v758 = verf.f32.pop %v710
        %v759 = verf.f32.pop %v711
        %v760 = verf.f32.pop %v712
        %v761 = verf.f32.pop %v713
        %v762 = verf.f32.pop %v714
        %v763 = verf.f32.pop %v715
        %v764 = verf.f32.pop %v716
        %v765 = verf.f32.pop %v717
        %v766 = verf.f32.pop %v718
        %v767 = verf.f32.pop %v719
        %v768 = verf.f32.pop %v720
        %v769 = verf.f32.pop %v721
        %v770 = verf.f32.pop %v722
        %v771 = verf.f32.pop %v723
        %v772 = verf.f32.pop %v724
        %v773 = verf.f32.pop %v725
        %v774 = verf.f32.pop %v726
        %v775 = verf.f32.pop %v727
        %v776 = verf.f32.pop %v728
        %v777 = verf.f32.pop %v729
        %v778 = verf.f32.pop %v730
        %v779 = verf.f32.pop %v731
        %v780 = verf.f32.pop %v732
        %v781 = verf.f32.pop %v733
        %v782 = verf.f32.pop %v734
        %v783 = verf.f32.pop %v735
        %v784 = verf.f32.pop %v736
        %v785 = verf.f32.pop %v737
        %v786 = verf.f32.pop %v738
        %v787 = verf.f32.pop %v739
        %v788 = verf.f32.pop %v740
        %v789 = verf.f32.pop %v741
        %v790 = verf.f32.pop %v742
        %v791 = verf.f32.pop %v743
        %v792 = verf.f32.pop %v744
        %v793 = verf.f32.pop %v745
        %v794 = verf.f32.pop %v746
        %v795 = verf.f32.pop %v747
        %v796 = verf.f32.pop %v748
        %v797 = verf.f32.pop %v749
        %v798 = verf.f32.pop %v750
        %v799 = verf.f32.pop %v751
        %v800 = verf.f32.pop %v752
        %v801 = verf.f32.pop %v753
        %v802 = verf.f32.pop %v754
        %v803 = verf.f32.pop %v755
        %v804 = verf.f32.pop %v756
        %v805 = vadd.f32 %v757, 1.0
        %v806 = vadd.f32 %v758, 1.0
        %v807 = vadd.f32 %v759, 1.0
        %v808 = vadd.f32 %v760, 1.0
        %v809 = vadd.f32 %v761, 1.0
        %v810 = vadd.f32 %v762, 1.0
        %v811 = vadd.f32 %v763, 1.0
        %v812 = vadd.f32 %v764, 1.0
        %v813 = vadd.f32 %v765, 1.0
        %v814 = vadd.f32 %v766, 1.0
        %v815 = vadd.f32 %v767, 1.0
        %v816 = vadd.f32 %v768, 1.0
        %v817 = vadd.f32 %v769, 1.0
        %v818 = vadd.f32 %v770, 1.0
        %v819 = vadd.f32 %v771, 1.0
        %v820 = vadd.f32 %v772, 1.0
        %v821 = vadd.f32 %v773, 1.0
        %v822 = vadd.f32 %v774, 1.0
        %v823 = vadd.f32 %v775, 1.0
        %v824 = vadd.f32 %v776, 1.0
        %v825 = vadd.f32 %v777, 1.0
        %v826 = vadd.f32 %v778, 1.0
        %v827 = vadd.f32 %v779, 1.0
        %v828 = vadd.f32 %v780, 1.0
        %v829 = vadd.f32 %v781, 1.0
        %v830 = vadd.f32 %v782, 1.0
        %v831 = vadd.f32 %v783, 1.0
        %v832 = vadd.f32 %v784, 1.0
        %v833 = vadd.f32 %v785, 1.0
        %v834 = vadd.f32 %v786, 1.0
        %v835 = vadd.f32 %v787, 1.0
        %v836 = vadd.f32 %v788, 1.0
        %v837 = vadd.f32 %v789, 1.0
        %v838 = vadd.f32 %v790, 1.0
        %v839 = vadd.f32 %v791, 1.0
        %v840 = vadd.f32 %v792, 1.0
        %v841 = vadd.f32 %v793, 1.0
        %v842 = vadd.f32 %v794, 1.0
        %v843 = vadd.f32 %v795, 1.0
        %v844 = vadd.f32 %v796, 1.0
        %v845 = vadd.f32 %v797, 1.0
        %v846 = vadd.f32 %v798, 1.0
        %v847 = vadd.f32 %v799, 1.0
        %v848 = vadd.f32 %v800, 1.0
        %v849 = vadd.f32 %v801, 1.0
        %v850 = vadd.f32 %v802, 1.0
        %v851 = vadd.f32 %v803, 1.0
        %v852 = vadd.f32 %v804, 1.0
        %v853 = vmul.f32 %v661, %v805
        %v854 = vmul.f32 %v662, %v806
        %v855 = vmul.f32 %v663, %v807
        %v856 = vmul.f32 %v664, %v808
        %v857 = vmul.f32 %v665, %v809
        %v858 = vmul.f32 %v666, %v810
        %v859 = vmul.f32 %v667, %v811
        %v860 = vmul.f32 %v668, %v812
        %v861 = vmul.f32 %v669, %v813
        %v862 = vmul.f32 %v670, %v814
        %v863 = vmul.f32 %v671, %v815
        %v864 = vmul.f32 %v672, %v816
        %v865 = vmul.f32 %v673, %v817
        %v866 = vmul.f32 %v674, %v818
        %v867 = vmul.f32 %v675, %v819
        %v868 = vmul.f32 %v676, %v820
        %v869 = vmul.f32 %v677, %v821
        %v870 = vmul.f32 %v678, %v822
        %v871 = vmul.f32 %v679, %v823
        %v872 = vmul.f32 %v680, %v824
        %v873 = vmul.f32 %v681, %v825
        %v874 = vmul.f32 %v682, %v826
        %v875 = vmul.f32 %v683, %v827
        %v876 = vmul.f32 %v684, %v828
        %v877 = vmul.f32 %v685, %v829
        %v878 = vmul.f32 %v686, %v830
        %v879 = vmul.f32 %v687, %v831
        %v880 = vmul.f32 %v688, %v832
        %v881 = vmul.f32 %v689, %v833
        %v882 = vmul.f32 %v690, %v834
        %v883 = vmul.f32 %v691, %v835
        %v884 = vmul.f32 %v692, %v836
        %v885 = vmul.f32 %v693, %v837
        %v886 = vmul.f32 %v694, %v838
        %v887 = vmul.f32 %v695, %v839
        %v888 = vmul.f32 %v696, %v840
        %v889 = vmul.f32 %v697, %v841
        %v890 = vmul.f32 %v698, %v842
        %v891 = vmul.f32 %v699, %v843
        %v892 = vmul.f32 %v700, %v844
        %v893 = vmul.f32 %v701, %v845
        %v894 = vmul.f32 %v702, %v846
        %v895 = vmul.f32 %v703, %v847
        %v896 = vmul.f32 %v704, %v848
        %v897 = vmul.f32 %v705, %v849
        %v898 = vmul.f32 %v706, %v850
        %v899 = vmul.f32 %v707, %v851
        %v900 = vmul.f32 %v708, %v852
        %v901 = vld [vmem:[#allocation7] sm:$0xff]
        %v902 = vld [vmem:[#allocation7 + $0x8] sm:$0xff]
        %v903 = vld [vmem:[#allocation7 + $0x10] sm:$0xff]
        %v904 = vld [vmem:[#allocation7 + $0x18] sm:$0xff]
        %v905 = vld [vmem:[#allocation7 + $0x20] sm:$0xff]
        %v906 = vld [vmem:[#allocation7 + $0x28] sm:$0xff]
        %v907 = vld [vmem:[#allocation7 + $0x30] sm:$0xff]
        %v908 = vld [vmem:[#allocation7 + $0x38] sm:$0xff]
        %v909 = vld [vmem:[#allocation7 + $0x40] sm:$0xff]
        %v910 = vld [vmem:[#allocation7 + $0x48] sm:$0xff]
        %v911 = vld [vmem:[#allocation7 + $0x50] sm:$0xff]
        %v912 = vld [vmem:[#allocation7 + $0x58] sm:$0xff]
        %v913 = vld [vmem:[#allocation7 + $0x60] sm:$0xff]
        %v914 = vld [vmem:[#allocation7 + $0x68] sm:$0xff]
        %v915 = vld [vmem:[#allocation7 + $0x70] sm:$0xff]
        %v916 = vld [vmem:[#allocation7 + $0x78] sm:$0xff]
        %v917 = vld [vmem:[#allocation7 + $0x80] sm:$0xff]
        %v918 = vld [vmem:[#allocation7 + $0x88] sm:$0xff]
        %v919 = vld [vmem:[#allocation7 + $0x90] sm:$0xff]
        %v920 = vld [vmem:[#allocation7 + $0x98] sm:$0xff]
        %v921 = vld [vmem:[#allocation7 + $0xa0] sm:$0xff]
        %v922 = vld [vmem:[#allocation7 + $0xa8] sm:$0xff]
        %v923 = vld [vmem:[#allocation7 + $0xb0] sm:$0xff]
        %v924 = vld [vmem:[#allocation7 + $0xb8] sm:$0xff]
        %v925 = vld [vmem:[#allocation7 + $0xc0] sm:$0xff]
        %v926 = vld [vmem:[#allocation7 + $0xc8] sm:$0xff]
        %v927 = vld [vmem:[#allocation7 + $0xd0] sm:$0xff]
        %v928 = vld [vmem:[#allocation7 + $0xd8] sm:$0xff]
        %v929 = vld [vmem:[#allocation7 + $0xe0] sm:$0xff]
        %v930 = vld [vmem:[#allocation7 + $0xe8] sm:$0xff]
        %v931 = vld [vmem:[#allocation7 + $0xf0] sm:$0xff]
        %v932 = vld [vmem:[#allocation7 + $0xf8] sm:$0xff]
        %v933 = vld [vmem:[#allocation7 + $0x100] sm:$0xff]
        %v934 = vld [vmem:[#allocation7 + $0x108] sm:$0xff]
        %v935 = vld [vmem:[#allocation7 + $0x110] sm:$0xff]
        %v936 = vld [vmem:[#allocation7 + $0x118] sm:$0xff]
        %v937 = vld [vmem:[#allocation7 + $0x120] sm:$0xff]
        %v938 = vld [vmem:[#allocation7 + $0x128] sm:$0xff]
        %v939 = vld [vmem:[#allocation7 + $0x130] sm:$0xff]
        %v940 = vld [vmem:[#allocation7 + $0x138] sm:$0xff]
        %v941 = vld [vmem:[#allocation7 + $0x140] sm:$0xff]
        %v942 = vld [vmem:[#allocation7 + $0x148] sm:$0xff]
        %v943 = vld [vmem:[#allocation7 + $0x150] sm:$0xff]
        %v944 = vld [vmem:[#allocation7 + $0x158] sm:$0xff]
        %v945 = vld [vmem:[#allocation7 + $0x160] sm:$0xff]
        %v946 = vld [vmem:[#allocation7 + $0x168] sm:$0xff]
        %v947 = vld [vmem:[#allocation7 + $0x170] sm:$0xff]
        %v948 = vld [vmem:[#allocation7 + $0x178] sm:$0xff]
        %v949 = vld [vmem:[%s4] sm:$0x1]
        %v951 = vlaneseq
        %v952 = vshrl.u32 %v951, 7
        %v953 = vsub.s32 0, %v952
        %v954 = vrot.slane %v949, %v953
        %956 = vmatprep.subr.mxu0 0.0
        %957 = vmatpush1.msra.mxu0 %v916
        %958 = vmatprep.subr.mxu0 0.0
        %959 = vmatpush1.msra.mxu0 %v915
        %960 = vmatprep.subr.mxu0 0.0
        %961 = vmatpush1.msra.mxu0 %v914
        %962 = vmatprep.subr.mxu0 0.0
        %963 = vmatpush1.msra.mxu0 %v913
        %964 = vmatprep.subr.mxu0 0.0
        %965 = vmatpush1.msra.mxu0 %v912
        %966 = vmatprep.subr.mxu0 0.0
        %967 = vmatpush1.msra.mxu0 %v911
        %968 = vmatprep.subr.mxu0 0.0
        %969 = vmatpush1.msra.mxu0 %v910
        %970 = vmatprep.subr.mxu0 0.0
        %971 = vmatpush1.msra.mxu0 %v909
        %972 = vmatprep.subr.mxu0 0.0
        %973 = vmatpush1.msra.mxu0 %v908
        %974 = vmatprep.subr.mxu0 0.0
        %975 = vmatpush1.msra.mxu0 %v907
        %976 = vmatprep.subr.mxu0 0.0
        %977 = vmatpush1.msra.mxu0 %v906
        %978 = vmatprep.subr.mxu0 0.0
        %979 = vmatpush1.msra.mxu0 %v905
        %980 = vmatprep.subr.mxu0 0.0
        %981 = vmatpush1.msra.mxu0 %v904
        %982 = vmatprep.subr.mxu0 0.0
        %983 = vmatpush1.msra.mxu0 %v903
        %984 = vmatprep.subr.mxu0 0.0
        %985 = vmatpush1.msra.mxu0 %v902
        %986 = vmatprep.subr.mxu0 0.0
        %987 = vmatpush1.msra.mxu0 %v901
        %988 = vmatprep.subr.mxu0 0.0
        %989 = vmatpush2.msra.mxu0 %v932
        %990 = vmatprep.subr.mxu0 0.0
        %991 = vmatpush2.msra.mxu0 %v931
        %992 = vmatprep.subr.mxu0 0.0
        %993 = vmatpush2.msra.mxu0 %v930
        %994 = vmatprep.subr.mxu0 0.0
        %995 = vmatpush2.msra.mxu0 %v929
        %996 = vmatprep.subr.mxu0 0.0
        %997 = vmatpush2.msra.mxu0 %v928
        %998 = vmatprep.subr.mxu0 0.0
        %999 = vmatpush2.msra.mxu0 %v927
        %1000 = vmatprep.subr.mxu0 0.0
        %1001 = vmatpush2.msra.mxu0 %v926
        %1002 = vmatprep.subr.mxu0 0.0
        %1003 = vmatpush2.msra.mxu0 %v925
        %1004 = vmatprep.subr.mxu0 0.0
        %1005 = vmatpush2.msra.mxu0 %v924
        %1006 = vmatprep.subr.mxu0 0.0
        %1007 = vmatpush2.msra.mxu0 %v923
        %1008 = vmatprep.subr.mxu0 0.0
        %1009 = vmatpush2.msra.mxu0 %v922
        %1010 = vmatprep.subr.mxu0 0.0
        %1011 = vmatpush2.msra.mxu0 %v921
        %1012 = vmatprep.subr.mxu0 0.0
        %1013 = vmatpush2.msra.mxu0 %v920
        %1014 = vmatprep.subr.mxu0 0.0
        %1015 = vmatpush2.msra.mxu0 %v919
        %1016 = vmatprep.subr.mxu0 0.0
        %1017 = vmatpush2.msra.mxu0 %v918
        %1018 = vmatprep.subr.mxu0 0.0
        %1019 = vmatpush2.msra.mxu0 %v917
        %1020 = vmatprep.mubr.f32.mxu0 %v854
        %1021 = vmatmul.mubr.f32.gmra.mxu0 %v853
        %v1022 = vpop.f32.mrf.mxu0
        %v1023 = vadd.f32 %v954, %v1022
        %v1024 = vpop.f32.mrf.mxu0
        %1025 = vmatprep.mubr.f32.mxu0 %v857
        %1026 = vmatmul.mubr.f32.gmra.mxu0 %v856
        %v1027 = vpop.f32.mrf.mxu0
        %v1028 = vadd.f32 %v954, %v1027
        %v1029 = vpop.f32.mrf.mxu0
        %1030 = vmatprep.mubr.f32.mxu0 %v860
        %1031 = vmatmul.mubr.f32.gmra.mxu0 %v859
        %v1032 = vpop.f32.mrf.mxu0
        %v1033 = vadd.f32 %v954, %v1032
        %v1034 = vpop.f32.mrf.mxu0
        %1035 = vmatprep.mubr.f32.mxu0 %v863
        %1036 = vmatmul.mubr.f32.gmra.mxu0 %v862
        %v1037 = vpop.f32.mrf.mxu0
        %v1038 = vadd.f32 %v954, %v1037
        %v1039 = vpop.f32.mrf.mxu0
        %1040 = vmatprep.mubr.f32.mxu0 %v866
        %1041 = vmatmul.mubr.f32.gmra.mxu0 %v865
        %v1042 = vpop.f32.mrf.mxu0
        %v1043 = vadd.f32 %v954, %v1042
        %v1044 = vpop.f32.mrf.mxu0
        %1045 = vmatprep.mubr.f32.mxu0 %v869
        %1046 = vmatmul.mubr.f32.gmra.mxu0 %v868
        %v1047 = vpop.f32.mrf.mxu0
        %v1048 = vadd.f32 %v954, %v1047
        %v1049 = vpop.f32.mrf.mxu0
        %1050 = vmatprep.mubr.f32.mxu0 %v872
        %1051 = vmatmul.mubr.f32.gmra.mxu0 %v871
        %v1052 = vpop.f32.mrf.mxu0
        %v1053 = vadd.f32 %v954, %v1052
        %v1054 = vpop.f32.mrf.mxu0
        %1055 = vmatprep.mubr.f32.mxu0 %v875
        %1056 = vmatmul.mubr.f32.gmra.mxu0 %v874
        %v1057 = vpop.f32.mrf.mxu0
        %v1058 = vadd.f32 %v954, %v1057
        %v1059 = vpop.f32.mrf.mxu0
        %1060 = vmatprep.mubr.f32.mxu0 %v878
        %1061 = vmatmul.mubr.f32.gmra.mxu0 %v877
        %v1062 = vpop.f32.mrf.mxu0
        %v1063 = vadd.f32 %v954, %v1062
        %v1064 = vpop.f32.mrf.mxu0
        %1065 = vmatprep.mubr.f32.mxu0 %v881
        %1066 = vmatmul.mubr.f32.gmra.mxu0 %v880
        %v1067 = vpop.f32.mrf.mxu0
        %v1068 = vadd.f32 %v954, %v1067
        %v1069 = vpop.f32.mrf.mxu0
        %1070 = vmatprep.mubr.f32.mxu0 %v884
        %1071 = vmatmul.mubr.f32.gmra.mxu0 %v883
        %v1072 = vpop.f32.mrf.mxu0
        %v1073 = vadd.f32 %v954, %v1072
        %v1074 = vpop.f32.mrf.mxu0
        %1075 = vmatprep.mubr.f32.mxu0 %v887
        %1076 = vmatmul.mubr.f32.gmra.mxu0 %v886
        %v1077 = vpop.f32.mrf.mxu0
        %v1078 = vadd.f32 %v954, %v1077
        %v1079 = vpop.f32.mrf.mxu0
        %1080 = vmatprep.mubr.f32.mxu0 %v890
        %1081 = vmatmul.mubr.f32.gmra.mxu0 %v889
        %v1082 = vpop.f32.mrf.mxu0
        %v1083 = vadd.f32 %v954, %v1082
        %v1084 = vpop.f32.mrf.mxu0
        %1085 = vmatprep.mubr.f32.mxu0 %v893
        %1086 = vmatmul.mubr.f32.gmra.mxu0 %v892
        %v1087 = vpop.f32.mrf.mxu0
        %v1088 = vadd.f32 %v954, %v1087
        %v1089 = vpop.f32.mrf.mxu0
        %1090 = vmatprep.mubr.f32.mxu0 %v896
        %1091 = vmatmul.mubr.f32.gmra.mxu0 %v895
        %v1092 = vpop.f32.mrf.mxu0
        %v1093 = vadd.f32 %v954, %v1092
        %v1094 = vpop.f32.mrf.mxu0
        %1095 = vmatprep.mubr.f32.mxu0 %v899
        %1096 = vmatmul.mubr.f32.gmra.mxu0 %v898
        %v1097 = vpop.f32.mrf.mxu0
        %v1098 = vadd.f32 %v954, %v1097
        %v1099 = vpop.f32.mrf.mxu0
        %1100 = vdwg.mxu0
        %1101 = vmatprep.subr.mxu0 0.0
        %1102 = vmatpush1.msra.mxu0 %v948
        %1103 = vmatprep.subr.mxu0 0.0
        %1104 = vmatpush1.msra.mxu0 %v947
        %1105 = vmatprep.subr.mxu0 0.0
        %1106 = vmatpush1.msra.mxu0 %v946
        %1107 = vmatprep.subr.mxu0 0.0
        %1108 = vmatpush1.msra.mxu0 %v945
        %1109 = vmatprep.subr.mxu0 0.0
        %1110 = vmatpush1.msra.mxu0 %v944
        %1111 = vmatprep.subr.mxu0 0.0
        %1112 = vmatpush1.msra.mxu0 %v943
        %1113 = vmatprep.subr.mxu0 0.0
        %1114 = vmatpush1.msra.mxu0 %v942
        %1115 = vmatprep.subr.mxu0 0.0
        %1116 = vmatpush1.msra.mxu0 %v941
        %1117 = vmatprep.subr.mxu0 0.0
        %1118 = vmatpush1.msra.mxu0 %v940
        %1119 = vmatprep.subr.mxu0 0.0
        %1120 = vmatpush1.msra.mxu0 %v939
        %1121 = vmatprep.subr.mxu0 0.0
        %1122 = vmatpush1.msra.mxu0 %v938
        %1123 = vmatprep.subr.mxu0 0.0
        %1124 = vmatpush1.msra.mxu0 %v937
        %1125 = vmatprep.subr.mxu0 0.0
        %1126 = vmatpush1.msra.mxu0 %v936
        %1127 = vmatprep.subr.mxu0 0.0
        %1128 = vmatpush1.msra.mxu0 %v935
        %1129 = vmatprep.subr.mxu0 0.0
        %1130 = vmatpush1.msra.mxu0 %v934
        %1131 = vmatprep.subr.mxu0 0.0
        %1132 = vmatpush1.msra.mxu0 %v933
        %1133 = vmatprep.subr.mxu0 0.0
        %1134 = vmatpush2.msra.mxu0 0.0
        %1135 = vmatprep.subr.mxu0 0.0
        %1136 = vmatpush2.msra.mxu0 0.0
        %1137 = vmatprep.subr.mxu0 0.0
        %1138 = vmatpush2.msra.mxu0 0.0
        %1139 = vmatprep.subr.mxu0 0.0
        %1140 = vmatpush2.msra.mxu0 0.0
        %1141 = vmatprep.subr.mxu0 0.0
        %1142 = vmatpush2.msra.mxu0 0.0
        %1143 = vmatprep.subr.mxu0 0.0
        %1144 = vmatpush2.msra.mxu0 0.0
        %1145 = vmatprep.subr.mxu0 0.0
        %1146 = vmatpush2.msra.mxu0 0.0
        %1147 = vmatprep.subr.mxu0 0.0
        %1148 = vmatpush2.msra.mxu0 0.0
        %1149 = vmatprep.subr.mxu0 0.0
        %1150 = vmatpush2.msra.mxu0 0.0
        %1151 = vmatprep.subr.mxu0 0.0
        %1152 = vmatpush2.msra.mxu0 0.0
        %1153 = vmatprep.subr.mxu0 0.0
        %1154 = vmatpush2.msra.mxu0 0.0
        %1155 = vmatprep.subr.mxu0 0.0
        %1156 = vmatpush2.msra.mxu0 0.0
        %1157 = vmatprep.subr.mxu0 0.0
        %1158 = vmatpush2.msra.mxu0 0.0
        %1159 = vmatprep.subr.mxu0 0.0
        %1160 = vmatpush2.msra.mxu0 0.0
        %1161 = vmatprep.subr.mxu0 0.0
        %1162 = vmatpush2.msra.mxu0 0.0
        %1163 = vmatprep.subr.mxu0 0.0
        %1164 = vmatpush2.msra.mxu0 0.0
        %1165 = vmatprep.mubr.f32.mxu0 0.0
        %1166 = vmatmul.mubr.f32.gmra.mxu0 %v855
        %v1167 = vpop.f32.mrf.mxu0
        %v1168 = vadd.f32 %v1023, %v1167
        %v1169 = vpop.f32.mrf.mxu0
        %1170 = vmatprep.mubr.f32.mxu0 0.0
        %1171 = vmatmul.mubr.f32.gmra.mxu0 %v858
        %v1172 = vpop.f32.mrf.mxu0
        %v1173 = vadd.f32 %v1028, %v1172
        %v1174 = vpop.f32.mrf.mxu0
        %1175 = vmatprep.mubr.f32.mxu0 0.0
        %1176 = vmatmul.mubr.f32.gmra.mxu0 %v861
        %v1177 = vpop.f32.mrf.mxu0
        %v1178 = vadd.f32 %v1033, %v1177
        %v1179 = vpop.f32.mrf.mxu0
        %1180 = vmatprep.mubr.f32.mxu0 0.0
        %1181 = vmatmul.mubr.f32.gmra.mxu0 %v864
        %v1182 = vpop.f32.mrf.mxu0
        %v1183 = vadd.f32 %v1038, %v1182
        %v1184 = vpop.f32.mrf.mxu0
        %1185 = vmatprep.mubr.f32.mxu0 0.0
        %1186 = vmatmul.mubr.f32.gmra.mxu0 %v867
        %v1187 = vpop.f32.mrf.mxu0
        %v1188 = vadd.f32 %v1043, %v1187
        %v1189 = vpop.f32.mrf.mxu0
        %1190 = vmatprep.mubr.f32.mxu0 0.0
        %1191 = vmatmul.mubr.f32.gmra.mxu0 %v870
        %v1192 = vpop.f32.mrf.mxu0
        %v1193 = vadd.f32 %v1048, %v1192
        %v1194 = vpop.f32.mrf.mxu0
        %1195 = vmatprep.mubr.f32.mxu0 0.0
        %1196 = vmatmul.mubr.f32.gmra.mxu0 %v873
        %v1197 = vpop.f32.mrf.mxu0
        %v1198 = vadd.f32 %v1053, %v1197
        %v1199 = vpop.f32.mrf.mxu0
        %1200 = vmatprep.mubr.f32.mxu0 0.0
        %1201 = vmatmul.mubr.f32.gmra.mxu0 %v876
        %v1202 = vpop.f32.mrf.mxu0
        %v1203 = vadd.f32 %v1058, %v1202
        %v1204 = vpop.f32.mrf.mxu0
        %1205 = vmatprep.mubr.f32.mxu0 0.0
        %1206 = vmatmul.mubr.f32.gmra.mxu0 %v879
        %v1207 = vpop.f32.mrf.mxu0
        %v1208 = vadd.f32 %v1063, %v1207
        %v1209 = vpop.f32.mrf.mxu0
        %1210 = vmatprep.mubr.f32.mxu0 0.0
        %1211 = vmatmul.mubr.f32.gmra.mxu0 %v882
        %v1212 = vpop.f32.mrf.mxu0
        %v1213 = vadd.f32 %v1068, %v1212
        %v1214 = vpop.f32.mrf.mxu0
        %1215 = vmatprep.mubr.f32.mxu0 0.0
        %1216 = vmatmul.mubr.f32.gmra.mxu0 %v885
        %v1217 = vpop.f32.mrf.mxu0
        %v1218 = vadd.f32 %v1073, %v1217
        %v1219 = vpop.f32.mrf.mxu0
        %1220 = vmatprep.mubr.f32.mxu0 0.0
        %1221 = vmatmul.mubr.f32.gmra.mxu0 %v888
        %v1222 = vpop.f32.mrf.mxu0
        %v1223 = vadd.f32 %v1078, %v1222
        %v1224 = vpop.f32.mrf.mxu0
        %1225 = vmatprep.mubr.f32.mxu0 0.0
        %1226 = vmatmul.mubr.f32.gmra.mxu0 %v891
        %v1227 = vpop.f32.mrf.mxu0
        %v1228 = vadd.f32 %v1083, %v1227
        %v1229 = vpop.f32.mrf.mxu0
        %1230 = vmatprep.mubr.f32.mxu0 0.0
        %1231 = vmatmul.mubr.f32.gmra.mxu0 %v894
        %v1232 = vpop.f32.mrf.mxu0
        %v1233 = vadd.f32 %v1088, %v1232
        %v1234 = vpop.f32.mrf.mxu0
        %1235 = vmatprep.mubr.f32.mxu0 0.0
        %1236 = vmatmul.mubr.f32.gmra.mxu0 %v897
        %v1237 = vpop.f32.mrf.mxu0
        %v1238 = vadd.f32 %v1093, %v1237
        %v1239 = vpop.f32.mrf.mxu0
        %1240 = vmatprep.mubr.f32.mxu0 0.0
        %1241 = vmatmul.mubr.f32.gmra.mxu0 %v900
        %v1242 = vpop.f32.mrf.mxu0
        %v1243 = vadd.f32 %v1098, %v1242
        %v1244 = vpop.f32.mrf.mxu0
        %1245 = vdwg.mxu0
        %1246 = vst [vmem:[%s271] sm:$0xff] %v1168
        %1247 = vst [vmem:[%s271 + $0x8] sm:$0xff] %v1173
        %1248 = vst [vmem:[%s271 + $0x10] sm:$0xff] %v1178
        %1249 = vst [vmem:[%s271 + $0x18] sm:$0xff] %v1183
        %1250 = vst [vmem:[%s271 + $0x20] sm:$0xff] %v1188
        %1251 = vst [vmem:[%s271 + $0x28] sm:$0xff] %v1193
        %1252 = vst [vmem:[%s271 + $0x30] sm:$0xff] %v1198
        %1253 = vst [vmem:[%s271 + $0x38] sm:$0xff] %v1203
        %1254 = vst [vmem:[%s271 + $0x40] sm:$0xff] %v1208
        %1255 = vst [vmem:[%s271 + $0x48] sm:$0xff] %v1213
        %1256 = vst [vmem:[%s271 + $0x50] sm:$0xff] %v1218
        %1257 = vst [vmem:[%s271 + $0x58] sm:$0xff] %v1223
        %1258 = vst [vmem:[%s271 + $0x60] sm:$0xff] %v1228
        %1259 = vst [vmem:[%s271 + $0x68] sm:$0xff] %v1233
        %1260 = vst [vmem:[%s271 + $0x70] sm:$0xff] %v1238
        %1261 = vst [vmem:[%s271 + $0x78] sm:$0xff] %v1243
        %s1262 = sand.u32 %s141, 1
        %s1263 = scalar_lea.sflag [#allocation4], %s1262
        %s1264 = sand.u32 %s141, 1
        %s1265 = smul.addr %s1264, 128
        %s1266 = scalar_lea.vmem [#allocation8], %s1265
        // Predicated region
        $region53: #{tpu_custom_call.1} parent=39 // pred_check
          %p1267 = pneg %p151
        $region54: #{tpu_custom_call.1} parent=39 // pred_check_branch
          %1269 = sbr.rel (%p1267) target = $region56
        $region55: #{tpu_custom_call.1} parent=39 // pred_region
          %s1270 = smul.u32 16, %s23
          %s1272 = ssub.s32 2048, 2048
          %1273 = vsyncadd %s1263, %s1272
          %s1274 = smul.addr %s1270, 128
          %s1275 = scalar_lea.hbm %s5, %s1274
          %s1276 = sshll.u32 %s1266, 4
          %s1277 = int_to_ptr.vmem [resolvable:$true] %s1276
          %1282 = dma.vmem_to_hbm [thread:$0]  %s1277, 2048, %s1275, %s1263, 128, 128, 8
        $region56: #{tpu_custom_call.1} parent=39 // pred_fallthru
          _
      $region40: #{tpu_custom_call.1} parent=5 // pred_fallthru
        _
      %p1283 = scmp.le.s32.totalorder 2, %s18
      // Predicated region
      $region57: #{tpu_custom_call.1} parent=5 // pred_check
        %p1284 = pneg %p1283
      $region58: #{tpu_custom_call.1} parent=5 // pred_check_branch
        %1286 = sbr.rel (%p1284) target = $region60
      $region59: #{tpu_custom_call.1} parent=5 // pred_region
        %s1287 = ssub.s32 %s18, 2
        // Predicated region
        $region61: #{tpu_custom_call.1} parent=59 // pred_check
          %p1288 = pneg %p157
        $region62: #{tpu_custom_call.1} parent=59 // pred_check_branch
          %1290 = sbr.rel (%p1288) target = $region64
        $region63: #{tpu_custom_call.1} parent=59 // pred_region
          %s1291 = sand.u32 %s142, 1
          %s1292 = scalar_lea.sflag [#allocation4], %s1291
          %s1293 = sand.u32 %s142, 1
          %s1294 = smul.addr %s1293, 128
          %s1295 = scalar_lea.vmem [#allocation8], %s1294
          %1296 = dma.done %s1292, 2048
        $region64: #{tpu_custom_call.1} parent=59 // pred_fallthru
          _
      $region60: #{tpu_custom_call.1} parent=5 // pred_fallthru
        _
    $region6: #{tpu_custom_call.1} parent=1 // loop_footer
      %s22 = sadd.s32 1, %s18
    $region7: #{tpu_custom_call.1} parent=1 // loop_footer_branch
      %17 = sbr.rel target = $region3
    $region8: #{tpu_custom_call.1} parent=1 // loop_exit
      _
    %1297 = vsyncpa [#allocation3], 1
    %s1298 = scalar_lea.sflag [#allocation3], 1
    %1299 = vsyncpa %s1298, 1
    %1300 = vsyncpa [#allocation6], 1
    %1301 = vsyncpa [#allocation4], 1
    %s1302 = scalar_lea.sflag [#allocation4], 1
    %1303 = vsyncpa %s1302, 1

</llo_original>
